<compile_context>
chip_gen: v5e
topology: v5e:2x2
jax: 0.10.0
libtpu: 0.0.40
codegen_flags: <defaults>
</compile_context>

<pallas_src>
import math
import functools

import jax
import jax.numpy as jnp
from jax.experimental import pallas as pl
from jax.experimental.pallas import tpu as pltpu


_INV_SQRT2 = 1.0 / math.sqrt(2.0)


def _gelu_exact(x):
    # PyTorch nn.GELU() default = exact erf formulation.
    return 0.5 * x * (1.0 + jax.lax.erf(x * _INV_SQRT2))


def mlp_proj_kernel(x_ref, w1_ref, b1_ref, w2_ref, b2_ref, g_ref, beta_ref, o_ref, *, eps):
    # x_ref:  (TM, D_clip)     block of input rows
    # w1_ref: (D_clip, D_clip) full weight 1 (resident, single-buffered)
    # b1_ref: (1, D_clip)
    # w2_ref: (D_clip, D_cross)
    # b2_ref: (1, D_cross)
    # g_ref/beta_ref: (1, D_cross) LayerNorm affine params
    # o_ref:  (TM, D_cross)

    # Linear 1: MXU in the native dtype (bf16 stays bf16), f32 accumulation.
    h = jnp.dot(x_ref[...], w1_ref[...], preferred_element_type=jnp.float32)
    h = _gelu_exact(h + b1_ref[...].astype(jnp.float32))

    # Linear 2: feed the MXU in the weight dtype, accumulate in f32.
    w2 = w2_ref[...]
    y = jnp.dot(h.astype(w2.dtype), w2, preferred_element_type=jnp.float32)
    y = y + b2_ref[...].astype(jnp.float32)

    # LayerNorm over last dim in f32; one-pass biased variance, eps inside rsqrt
    # (matches torch.nn.LayerNorm).
    mean = jnp.mean(y, axis=-1, keepdims=True)
    mean_sq = jnp.mean(y * y, axis=-1, keepdims=True)
    var = jnp.maximum(mean_sq - mean * mean, 0.0)
    inv = jax.lax.rsqrt(var + eps)
    out = (y - mean) * inv * g_ref[...].astype(jnp.float32) + beta_ref[...].astype(jnp.float32)

    o_ref[...] = out.astype(o_ref.dtype)


def _round_up(x, m):
    return ((x + m - 1) // m) * m


def _auto_row_tile(m_rows, itemsize, cap=512):
    """Pick a large row tile (multiple of the sublane packing) for MXU utilization."""
    sub = 8 * max(1, 4 // max(1, itemsize))  # 8 for f32, 16 for bf16, 32 for int8
    if m_rows <= sub:
        return sub
    # Keep tiles large but prefer >=2 grid steps so both v7x TensorCores get work.
    return min(cap, _round_up(pl.cdiv(m_rows, 2), sub))


def _const_spec(block_shape):
    """BlockSpec for a grid-invariant operand; single-buffered when supported."""
    index_map = lambda i: tuple(0 for _ in block_shape)
    try:
        return pl.BlockSpec(block_shape, index_map, pipeline_mode=pl.Buffered(1))
    except (TypeError, ValueError, AttributeError):
        # Older Pallas without pipeline_mode / Buffered: default buffering still correct.
        return pl.BlockSpec(block_shape, index_map)


def mlp_proj_model(image_embeds, params, *, eps=1e-5, tm=None):
    """image_embeds: [B, S, D_clip] -> [B, S, D_cross]."""
    w1, b1, w2, b2, gamma, beta = (
        params["w1"], params["b1"], params["w2"], params["b2"],
        params["ln_gamma"], params["ln_beta"],
    )
    B, S, d_clip = image_embeds.shape
    d_cross = w2.shape[1]
    M = B * S

    if tm is None:
        tm = _auto_row_tile(M, jnp.dtype(image_embeds.dtype).itemsize)
    M_pad = _round_up(M, tm)

    x2d = image_embeds.reshape(M, d_clip)
    if M_pad != M:
        # Pad the ragged last tile instead of shrinking tm (keeps MXU tiles large).
        x2d = jnp.pad(x2d, ((0, M_pad - M), (0, 0)))

    b1_2d = b1.reshape(1, d_clip)
    b2_2d = b2.reshape(1, d_cross)
    g_2d = gamma.reshape(1, d_cross)
    be_2d = beta.reshape(1, d_cross)

    grid = (M_pad // tm,)
    out = pl.pallas_call(
        functools.partial(mlp_proj_kernel, eps=eps),
        out_shape=jax.ShapeDtypeStruct((M_pad, d_cross), image_embeds.dtype),
        grid_spec=pltpu.PrefetchScalarGridSpec(
            num_scalar_prefetch=0,
            grid=grid,
            in_specs=[
                pl.BlockSpec((tm, d_clip), lambda i: (i, 0)),  # x rows (pipelined)
                _const_spec((d_clip, d_clip)),                  # W1 (resident)
                _const_spec((1, d_clip)),                       # b1
                _const_spec((d_clip, d_cross)),                 # W2 (resident)
                _const_spec((1, d_cross)),                      # b2
                _const_spec((1, d_cross)),                      # LN gamma
                _const_spec((1, d_cross)),                      # LN beta
            ],
            out_specs=pl.BlockSpec((tm, d_cross), lambda i: (i, 0)),
        ),
        compiler_params=pltpu.CompilerParams(
            dimension_semantics=("parallel",),
            # Resident weights + double-buffered x/out tiles + f32 intermediates;
            # explicit budget so larger tiles compile, while fitting v7x's 64 MiB VMEM.
            vmem_limit_bytes=48 * 1024 * 1024,
        ),
    )(x2d, w1, b1_2d, w2, b2_2d, g_2d, be_2d)

    if M_pad != M:
        out = out[:M]
    return out.reshape(B, S, d_cross)


def init_params(key, clip_embeddings_dim, cross_attention_dim, dtype=jnp.float32):
    """Deterministic synthetic init (same shapes as the PyTorch module)."""
    k1, k2, k3, k4 = jax.random.split(key, 4)
    # Stored as [in, out] (transpose of PyTorch Linear's [out, in]).
    w1 = jax.random.normal(k1, (clip_embeddings_dim, clip_embeddings_dim), dtype) * 0.02
    b1 = jax.random.normal(k2, (clip_embeddings_dim,), dtype) * 0.02
    w2 = jax.random.normal(k3, (clip_embeddings_dim, cross_attention_dim), dtype) * 0.02
    b2 = jax.random.normal(k4, (cross_attention_dim,), dtype) * 0.02
    ln_gamma = jnp.ones((cross_attention_dim,), dtype)
    ln_beta = jnp.zeros((cross_attention_dim,), dtype)
    return dict(w1=w1, b1=b1, w2=w2, b2=b2, ln_gamma=ln_gamma, ln_beta=ln_beta)


def _reference(image_embeds, params, eps=1e-5):
    """Pure-JAX reference matching the PyTorch forward (exact GELU, two-pass LN)."""
    x = image_embeds.astype(jnp.float32)
    h = x @ params["w1"].astype(jnp.float32) + params["b1"].astype(jnp.float32)
    h = 0.5 * h * (1.0 + jax.lax.erf(h / jnp.sqrt(2.0)))
    y = h @ params["w2"].astype(jnp.float32) + params["b2"].astype(jnp.float32)
    mean = jnp.mean(y, axis=-1, keepdims=True)
    var = jnp.mean((y - mean) ** 2, axis=-1, keepdims=True)
    out = (y - mean) * jax.lax.rsqrt(var + eps)
    out = out * params["ln_gamma"].astype(jnp.float32) + params["ln_beta"].astype(jnp.float32)
    return out.astype(image_embeds.dtype)


if __name__ == "__main__":
    # Small shapes consistent with the module (default dims 1024 scaled down).
    B, S = 2, 8
    clip_embeddings_dim = 128
    cross_attention_dim = 128

    key = jax.random.PRNGKey(0)
    k_x, k_p = jax.random.split(key)
    image_embeds = jax.random.normal(k_x, (B, S, clip_embeddings_dim), jnp.float32)
    params = init_params(k_p, clip_embeddings_dim, cross_attention_dim)

    out = mlp_proj_model(image_embeds, params)
    out = jax.block_until_ready(out)

    ref = _reference(image_embeds, params)
    assert out.shape == (B, S, cross_attention_dim)
    assert jnp.allclose(out, ref, atol=5e-5, rtol=5e-5), "mismatch vs reference"

    print("KERNEL_OK")
</pallas_src>

<mosaic_0001>
module attributes {stable_mosaic.version = 11 : i64} {
  func.func @mlp_proj_kernel(%arg0: i32, %arg1: memref<8x128xf32, #tpu.memory_space<vmem>>, %arg2: memref<128x128xf32, #tpu.memory_space<vmem>>, %arg3: memref<1x128xf32, #tpu.memory_space<vmem>>, %arg4: memref<128x128xf32, #tpu.memory_space<vmem>>, %arg5: memref<1x128xf32, #tpu.memory_space<vmem>>, %arg6: memref<1x128xf32, #tpu.memory_space<vmem>>, %arg7: memref<1x128xf32, #tpu.memory_space<vmem>>, %arg8: memref<8x128xf32, #tpu.memory_space<vmem>>) attributes {dimension_semantics = [#tpu.dimension_semantics<parallel>], iteration_bounds = array<i64: 2>, scalar_prefetch = 0 : i64, scratch_operands = 0 : i64, tpu.core_type = #tpu.core_type<tc>, window_params = [{transform_indices = @transform_0, window_bounds = array<i64: 8, 128>}, {pipeline_mode = #tpu.pipeline_mode<synchronous>, transform_indices = @transform_1, window_bounds = array<i64: 128, 128>}, {pipeline_mode = #tpu.pipeline_mode<synchronous>, transform_indices = @transform_2, window_bounds = array<i64: 1, 128>}, {pipeline_mode = #tpu.pipeline_mode<synchronous>, transform_indices = @transform_3, window_bounds = array<i64: 128, 128>}, {pipeline_mode = #tpu.pipeline_mode<synchronous>, transform_indices = @transform_4, window_bounds = array<i64: 1, 128>}, {pipeline_mode = #tpu.pipeline_mode<synchronous>, transform_indices = @transform_5, window_bounds = array<i64: 1, 128>}, {pipeline_mode = #tpu.pipeline_mode<synchronous>, transform_indices = @transform_6, window_bounds = array<i64: 1, 128>}, {transform_indices = @transform_7, window_bounds = array<i64: 8, 128>}]} {
    %c0 = arith.constant 0 : index
    %c0_0 = arith.constant 0 : index
    %0 = vector.load %arg1[%c0, %c0_0] : memref<8x128xf32, #tpu.memory_space<vmem>>, vector<8x128xf32>
    %c0_1 = arith.constant 0 : index
    %c0_2 = arith.constant 0 : index
    %1 = vector.load %arg2[%c0_1, %c0_2] : memref<128x128xf32, #tpu.memory_space<vmem>>, vector<128x128xf32>
    %cst = arith.constant dense<0.000000e+00> : vector<8x128xf32>
    %2 = tpu.matmul %0, %1, %cst {dimension_numbers = #tpu.dot_dimension_numbers<[1], [0], [0], [1], [0, 0, 1, 1], [], []>} : vector<8x128xf32>, vector<128x128xf32>, vector<8x128xf32> -> vector<8x128xf32>
    %c0_3 = arith.constant 0 : index
    %c0_4 = arith.constant 0 : index
    %3 = vector.load %arg3[%c0_3, %c0_4] : memref<1x128xf32, #tpu.memory_space<vmem>>, vector<1x128xf32>
    %4 = vector.broadcast %3 : vector<1x128xf32> to vector<8x128xf32>
    %5 = arith.addf %2, %4 : vector<8x128xf32>
    %cst_5 = arith.constant 5.000000e-01 : f32
    %6 = vector.broadcast %cst_5 : f32 to vector<8x128xf32>
    %7 = arith.mulf %6, %5 : vector<8x128xf32>
    %cst_6 = arith.constant 0.707106769 : f32
    %8 = vector.broadcast %cst_6 : f32 to vector<8x128xf32>
    %9 = arith.mulf %5, %8 : vector<8x128xf32>
    %10 = math.erf %9 : vector<8x128xf32>
    %cst_7 = arith.constant 1.000000e+00 : f32
    %11 = vector.broadcast %cst_7 : f32 to vector<8x128xf32>
    %12 = arith.addf %11, %10 : vector<8x128xf32>
    %13 = arith.mulf %7, %12 : vector<8x128xf32>
    %c0_8 = arith.constant 0 : index
    %c0_9 = arith.constant 0 : index
    %14 = vector.load %arg4[%c0_8, %c0_9] : memref<128x128xf32, #tpu.memory_space<vmem>>, vector<128x128xf32>
    %cst_10 = arith.constant dense<0.000000e+00> : vector<8x128xf32>
    %15 = tpu.matmul %13, %14, %cst_10 {dimension_numbers = #tpu.dot_dimension_numbers<[1], [0], [0], [1], [0, 0, 1, 1], [], []>} : vector<8x128xf32>, vector<128x128xf32>, vector<8x128xf32> -> vector<8x128xf32>
    %c0_11 = arith.constant 0 : index
    %c0_12 = arith.constant 0 : index
    %16 = vector.load %arg5[%c0_11, %c0_12] : memref<1x128xf32, #tpu.memory_space<vmem>>, vector<1x128xf32>
    %17 = vector.broadcast %16 : vector<1x128xf32> to vector<8x128xf32>
    %18 = arith.addf %15, %17 : vector<8x128xf32>
    %cst_13 = arith.constant dense<0.000000e+00> : vector<8xf32>
    %19 = vector.multi_reduction <add>, %18, %cst_13 [1] : vector<8x128xf32> to vector<8xf32>
    %20 = vector.shape_cast %19 : vector<8xf32> to vector<8x1xf32>
    %cst_14 = arith.constant 1.280000e+02 : f32
    %21 = vector.broadcast %cst_14 : f32 to vector<8x1xf32>
    %22 = arith.divf %20, %21 : vector<8x1xf32>
    %23 = arith.mulf %18, %18 : vector<8x128xf32>
    %cst_15 = arith.constant dense<0.000000e+00> : vector<8xf32>
    %24 = vector.multi_reduction <add>, %23, %cst_15 [1] : vector<8x128xf32> to vector<8xf32>
    %25 = vector.shape_cast %24 : vector<8xf32> to vector<8x1xf32>
    %cst_16 = arith.constant 1.280000e+02 : f32
    %26 = vector.broadcast %cst_16 : f32 to vector<8x1xf32>
    %27 = arith.divf %25, %26 : vector<8x1xf32>
    %28 = arith.mulf %22, %22 : vector<8x1xf32>
    %29 = arith.subf %27, %28 : vector<8x1xf32>
    %cst_17 = arith.constant 0.000000e+00 : f32
    %30 = vector.broadcast %cst_17 : f32 to vector<8x1xf32>
    %31 = arith.maximumf %29, %30 : vector<8x1xf32>
    %cst_18 = arith.constant 9.99999974E-6 : f32
    %32 = vector.broadcast %cst_18 : f32 to vector<8x1xf32>
    %33 = arith.addf %31, %32 : vector<8x1xf32>
    %34 = math.rsqrt %33 : vector<8x1xf32>
    %35 = vector.broadcast %22 : vector<8x1xf32> to vector<8x128xf32>
    %36 = arith.subf %18, %35 : vector<8x128xf32>
    %37 = vector.broadcast %34 : vector<8x1xf32> to vector<8x128xf32>
    %38 = arith.mulf %36, %37 : vector<8x128xf32>
    %c0_19 = arith.constant 0 : index
    %c0_20 = arith.constant 0 : index
    %39 = vector.load %arg6[%c0_19, %c0_20] : memref<1x128xf32, #tpu.memory_space<vmem>>, vector<1x128xf32>
    %40 = vector.broadcast %39 : vector<1x128xf32> to vector<8x128xf32>
    %41 = arith.mulf %38, %40 : vector<8x128xf32>
    %c0_21 = arith.constant 0 : index
    %c0_22 = arith.constant 0 : index
    %42 = vector.load %arg7[%c0_21, %c0_22] : memref<1x128xf32, #tpu.memory_space<vmem>>, vector<1x128xf32>
    %43 = vector.broadcast %42 : vector<1x128xf32> to vector<8x128xf32>
    %44 = arith.addf %41, %43 : vector<8x128xf32>
    %c0_23 = arith.constant 0 : index
    %c0_24 = arith.constant 0 : index
    %45 = vector.load %arg8[%c0_23, %c0_24] : memref<8x128xf32, #tpu.memory_space<vmem>>, vector<8x128xf32>
    tpu.vector_store %arg8[%c0_23, %c0_24], %44 {strides = array<i32>} : memref<8x128xf32, #tpu.memory_space<vmem>>, vector<8x128xf32>,
    return
  }
  func.func @transform_0(%arg0: i32) -> (i32, i32) {
    %c0_i32 = arith.constant 0 : i32
    %c0_i32_0 = arith.constant 0 : i32
    return %arg0, %c0_i32 : i32, i32
  }
  func.func @transform_1(%arg0: i32) -> (i32, i32) {
    %c0_i32 = arith.constant 0 : i32
    %c0_i32_0 = arith.constant 0 : i32
    %c0_i32_1 = arith.constant 0 : i32
    return %c0_i32, %c0_i32_0 : i32, i32
  }
  func.func @transform_2(%arg0: i32) -> (i32, i32) {
    %c0_i32 = arith.constant 0 : i32
    %c0_i32_0 = arith.constant 0 : i32
    %c0_i32_1 = arith.constant 0 : i32
    return %c0_i32, %c0_i32_0 : i32, i32
  }
  func.func @transform_3(%arg0: i32) -> (i32, i32) {
    %c0_i32 = arith.constant 0 : i32
    %c0_i32_0 = arith.constant 0 : i32
    %c0_i32_1 = arith.constant 0 : i32
    return %c0_i32, %c0_i32_0 : i32, i32
  }
  func.func @transform_4(%arg0: i32) -> (i32, i32) {
    %c0_i32 = arith.constant 0 : i32
    %c0_i32_0 = arith.constant 0 : i32
    %c0_i32_1 = arith.constant 0 : i32
    return %c0_i32, %c0_i32_0 : i32, i32
  }
  func.func @transform_5(%arg0: i32) -> (i32, i32) {
    %c0_i32 = arith.constant 0 : i32
    %c0_i32_0 = arith.constant 0 : i32
    %c0_i32_1 = arith.constant 0 : i32
    return %c0_i32, %c0_i32_0 : i32, i32
  }
  func.func @transform_6(%arg0: i32) -> (i32, i32) {
    %c0_i32 = arith.constant 0 : i32
    %c0_i32_0 = arith.constant 0 : i32
    %c0_i32_1 = arith.constant 0 : i32
    return %c0_i32, %c0_i32_0 : i32, i32
  }
  func.func @transform_7(%arg0: i32) -> (i32, i32) {
    %c0_i32 = arith.constant 0 : i32
    %c0_i32_0 = arith.constant 0 : i32
    return %arg0, %c0_i32 : i32, i32
  }
}

</mosaic_0001>

<llo_original>
// kernel: tpu_custom_call.1
$region0: #{tpu_custom_call.1}
  #allocation0 [shape = 'u32[]', space=smem, size = 0x4, offset = 0x4, fixed_abs, tag = 'smem constant byte address 0x4 - core index']
  #allocation1 [shape = 'u32[72,128]{1,0:T(1,128)}', space=vmem, size = 0x9000, scoped, tag = 'internal scratch']
  %s0 = inlined_call_operand.hbm [shape: f32[16,128], index: 0, kind: input, shape index: {}]
  %s1 = inlined_call_operand.hbm [shape: f32[128,128], index: 1, kind: input, shape index: {}]
  %s2 = inlined_call_operand.vmem [shape: f32[1,128], index: 2, kind: input, shape index: {}]
  %s3 = inlined_call_operand.hbm [shape: f32[128,128], index: 3, kind: input, shape index: {}]
  %s4 = inlined_call_operand.vmem [shape: f32[1,128], index: 4, kind: input, shape index: {}]
  %s5 = inlined_call_operand.vmem [shape: f32[1,128], index: 5, kind: input, shape index: {}]
  %s6 = inlined_call_operand.vmem [shape: f32[1,128], index: 6, kind: input, shape index: {}]
  %s7 = inlined_call_operand.hbm [shape: f32[16,128], index: 7, kind: output, shape index: {}]
  %s8 = sld [smem:[#allocation0]]
  $region73: #{tpu_custom_call.1} parent=0
    _
  %s10 = ssub.s32 1, %s8
  %s11 = scalar_select 0, %s10, %s8
  $region1: #{tpu_custom_call.1} parent=0
    #allocation2 [shape = 'u8[8192]{0}', space=vmem, size = 0x2000, scoped, tag = 'input window, operand 0']
    #allocation3 [shape = 's32[2]{0}', space=sflag, size = 0x8, scoped, tag = 'scoped memory for tpu_custom_call.1']
    #allocation4 [shape = 's32[2]{0}', space=sflag, size = 0x8, scoped, tag = 'scoped memory for tpu_custom_call.1']
    #allocation5 [shape = 'u8[65536]{0}', space=vmem, size = 0x10000, scoped, tag = 'input window, operand 1, single buffered']
    #allocation6 [shape = 's32[1]{0}', space=sflag, size = 0x4, scoped, tag = 'scoped memory for tpu_custom_call.1']
    #allocation7 [shape = 'u8[65536]{0}', space=vmem, size = 0x10000, scoped, tag = 'input window, operand 3, single buffered']
    #allocation8 [shape = 'u8[8192]{0}', space=vmem, size = 0x2000, scoped, tag = 'output window, operand 0']
    %12 = vsyncpa [#allocation3], 0
    %s13 = scalar_lea.sflag [#allocation3], 1
    %14 = vsyncpa %s13, 0
    %15 = vsyncpa [#allocation6], 0
    %16 = vsyncpa [#allocation4], 0
    %s17 = scalar_lea.sflag [#allocation4], 1
    %18 = vsyncpa %s17, 0
    loop: start=0, step=1, limit=4
    $region2: #{tpu_custom_call.1} parent=1 // loop_pre_header
      _
    $region3: #{tpu_custom_call.1} parent=1 // loop_header
      %s20 = sphi 0, %s24
      %p21 = scmp.ge.s32.totalorder %s20, 4
      %s30 = sphi 0, %s32
      %s33 = sphi 0, %s30
      %s34 = sphi 0, %s33
      %s50 = sphi 0, %s34
      %s54 = sphi 0, %s54
      %s56 = sphi 0, %s54
      %s57 = sphi 0, %s56
      %s71 = sphi 0, %s57
      %s75 = sphi 0, %s75
      %s77 = sphi 0, %s75
      %s78 = sphi 0, %s77
      %s92 = sphi 0, %s78
      %s96 = sphi 0, %s96
      %s98 = sphi 0, %s96
      %s99 = sphi 0, %s98
      %s113 = sphi 0, %s99
      %s117 = sphi 0, %s117
      %s119 = sphi 0, %s117
      %s120 = sphi 0, %s119
      %s134 = sphi 0, %s120
      %s138 = sphi 0, %s138
      %s140 = sphi 0, %s138
      %s141 = sphi 0, %s140
      %s155 = sphi 0, %s141
      %s159 = sphi 0, %s159
      %s161 = sphi 0, %s159
      %s162 = sphi 0, %s161
      %s176 = sphi 0, %s162
      %s182 = sphi 0, %s184
      %s185 = sphi 0, %s182
      %s186 = sphi 0, %s185
      %s202 = sphi 0, %s186
    $region4: #{tpu_custom_call.1} parent=1 // loop_header_branch
      %23 = sbr.rel (%p21) target = $region8
    $region5: #{tpu_custom_call.1} parent=1 // loop_body
      %s25 = ssub.s32 %s20, 1
      %s26 = ssub.s32 %s20, 2
      %s27 = sadd.s32 %s20, 1
      %s28 = ssub.s32 %s20, %s27
      %p29 = scmp.eq.s32.totalorder %s28, 0
      %s31 = sadd.s32 %s30, 1
      %s32 = scalar_select %p29, %s30, %s31
      %p35 = pneg %p29
      %p36 = scmp.eq.s32.totalorder %s20, 1
      %p37 = por %p35, %p36
      %p38 = scmp.ne.s32.totalorder %s30, %s33
      %p39 = scmp.eq.s32.totalorder %s20, 0
      %p40 = por %p38, %p39
      %p41 = scmp.ne.s32.totalorder %s30, %s33
      %p42 = scmp.eq.s32.totalorder %s25, 1
      %p43 = por %p41, %p42
      %p44 = scmp.ne.s32.totalorder %s33, %s34
      %p45 = scmp.eq.s32.totalorder %s25, 0
      %p46 = por %p44, %p45
      %p47 = scmp.ne.s32.totalorder %s33, %s34
      %p48 = scmp.eq.s32.totalorder %s26, 1
      %p49 = por %p47, %p48
      %p51 = scmp.ne.s32.totalorder %s34, %s50
      %p52 = scmp.eq.s32.totalorder %s26, 0
      %p53 = por %p51, %p52
      %s55 = sadd.s32 %s54, 1
      %p58 = scmp.eq.s32.totalorder %s20, 1
      %p59 = scmp.ne.s32.totalorder %s54, %s56
      %p60 = scmp.eq.s32.totalorder %s20, 0
      %p61 = por %p59, %p60
      %p62 = scmp.ne.s32.totalorder %s54, %s56
      %p63 = scmp.eq.s32.totalorder %s25, 1
      %p64 = por %p62, %p63
      %p65 = scmp.ne.s32.totalorder %s56, %s57
      %p66 = scmp.eq.s32.totalorder %s25, 0
      %p67 = por %p65, %p66
      %p68 = scmp.ne.s32.totalorder %s56, %s57
      %p69 = scmp.eq.s32.totalorder %s26, 1
      %p70 = por %p68, %p69
      %p72 = scmp.ne.s32.totalorder %s57, %s71
      %p73 = scmp.eq.s32.totalorder %s26, 0
      %p74 = por %p72, %p73
      %s76 = sadd.s32 %s75, 1
      %p79 = scmp.eq.s32.totalorder %s20, 1
      %p80 = scmp.ne.s32.totalorder %s75, %s77
      %p81 = scmp.eq.s32.totalorder %s20, 0
      %p82 = por %p80, %p81
      %p83 = scmp.ne.s32.totalorder %s75, %s77
      %p84 = scmp.eq.s32.totalorder %s25, 1
      %p85 = por %p83, %p84
      %p86 = scmp.ne.s32.totalorder %s77, %s78
      %p87 = scmp.eq.s32.totalorder %s25, 0
      %p88 = por %p86, %p87
      %p89 = scmp.ne.s32.totalorder %s77, %s78
      %p90 = scmp.eq.s32.totalorder %s26, 1
      %p91 = por %p89, %p90
      %p93 = scmp.ne.s32.totalorder %s78, %s92
      %p94 = scmp.eq.s32.totalorder %s26, 0
      %p95 = por %p93, %p94
      %s97 = sadd.s32 %s96, 1
      %p100 = scmp.eq.s32.totalorder %s20, 1
      %p101 = scmp.ne.s32.totalorder %s96, %s98
      %p102 = scmp.eq.s32.totalorder %s20, 0
      %p103 = por %p101, %p102
      %p104 = scmp.ne.s32.totalorder %s96, %s98
      %p105 = scmp.eq.s32.totalorder %s25, 1
      %p106 = por %p104, %p105
      %p107 = scmp.ne.s32.totalorder %s98, %s99
      %p108 = scmp.eq.s32.totalorder %s25, 0
      %p109 = por %p107, %p108
      %p110 = scmp.ne.s32.totalorder %s98, %s99
      %p111 = scmp.eq.s32.totalorder %s26, 1
      %p112 = por %p110, %p111
      %p114 = scmp.ne.s32.totalorder %s99, %s113
      %p115 = scmp.eq.s32.totalorder %s26, 0
      %p116 = por %p114, %p115
      %s118 = sadd.s32 %s117, 1
      %p121 = scmp.eq.s32.totalorder %s20, 1
      %p122 = scmp.ne.s32.totalorder %s117, %s119
      %p123 = scmp.eq.s32.totalorder %s20, 0
      %p124 = por %p122, %p123
      %p125 = scmp.ne.s32.totalorder %s117, %s119
      %p126 = scmp.eq.s32.totalorder %s25, 1
      %p127 = por %p125, %p126
      %p128 = scmp.ne.s32.totalorder %s119, %s120
      %p129 = scmp.eq.s32.totalorder %s25, 0
      %p130 = por %p128, %p129
      %p131 = scmp.ne.s32.totalorder %s119, %s120
      %p132 = scmp.eq.s32.totalorder %s26, 1
      %p133 = por %p131, %p132
      %p135 = scmp.ne.s32.totalorder %s120, %s134
      %p136 = scmp.eq.s32.totalorder %s26, 0
      %p137 = por %p135, %p136
      %s139 = sadd.s32 %s138, 1
      %p142 = scmp.eq.s32.totalorder %s20, 1
      %p143 = scmp.ne.s32.totalorder %s138, %s140
      %p144 = scmp.eq.s32.totalorder %s20, 0
      %p145 = por %p143, %p144
      %p146 = scmp.ne.s32.totalorder %s138, %s140
      %p147 = scmp.eq.s32.totalorder %s25, 1
      %p148 = por %p146, %p147
      %p149 = scmp.ne.s32.totalorder %s140, %s141
      %p150 = scmp.eq.s32.totalorder %s25, 0
      %p151 = por %p149, %p150
      %p152 = scmp.ne.s32.totalorder %s140, %s141
      %p153 = scmp.eq.s32.totalorder %s26, 1
      %p154 = por %p152, %p153
      %p156 = scmp.ne.s32.totalorder %s141, %s155
      %p157 = scmp.eq.s32.totalorder %s26, 0
      %p158 = por %p156, %p157
      %s160 = sadd.s32 %s159, 1
      %p163 = scmp.eq.s32.totalorder %s20, 1
      %p164 = scmp.ne.s32.totalorder %s159, %s161
      %p165 = scmp.eq.s32.totalorder %s20, 0
      %p166 = por %p164, %p165
      %p167 = scmp.ne.s32.totalorder %s159, %s161
      %p168 = scmp.eq.s32.totalorder %s25, 1
      %p169 = por %p167, %p168
      %p170 = scmp.ne.s32.totalorder %s161, %s162
      %p171 = scmp.eq.s32.totalorder %s25, 0
      %p172 = por %p170, %p171
      %p173 = scmp.ne.s32.totalorder %s161, %s162
      %p174 = scmp.eq.s32.totalorder %s26, 1
      %p175 = por %p173, %p174
      %p177 = scmp.ne.s32.totalorder %s162, %s176
      %p178 = scmp.eq.s32.totalorder %s26, 0
      %p179 = por %p177, %p178
      %s180 = ssub.s32 %s20, %s27
      %p181 = scmp.eq.s32.totalorder %s180, 0
      %s183 = sadd.s32 %s182, 1
      %s184 = scalar_select %p181, %s182, %s183
      %p187 = pneg %p181
      %p188 = scmp.eq.s32.totalorder %s20, 1
      %p189 = por %p187, %p188
      %p190 = scmp.ne.s32.totalorder %s182, %s185
      %p191 = scmp.eq.s32.totalorder %s20, 0
      %p192 = por %p190, %p191
      %p193 = scmp.ne.s32.totalorder %s182, %s185
      %p194 = scmp.eq.s32.totalorder %s25, 1
      %p195 = por %p193, %p194
      %p196 = scmp.ne.s32.totalorder %s185, %s186
      %p197 = scmp.eq.s32.totalorder %s25, 0
      %p198 = por %p196, %p197
      %p199 = scmp.ne.s32.totalorder %s185, %s186
      %p200 = scmp.eq.s32.totalorder %s26, 1
      %p201 = por %p199, %p200
      %p203 = scmp.ne.s32.totalorder %s186, %s202
      %p204 = scmp.eq.s32.totalorder %s26, 0
      %p205 = por %p203, %p204
      %p206 = scmp.le.s32.totalorder 1, %s20
      %p207 = scmp.lt.s32.totalorder %s20, 3
      %p208 = pnand %p206, %p207
      %p209 = pneg %p208
      // Predicated region
      $region9: #{tpu_custom_call.1} parent=5 // pred_check
        _
      $region10: #{tpu_custom_call.1} parent=5 // pred_check_branch
        %211 = sbr.rel (%p208) target = $region12
      $region11: #{tpu_custom_call.1} parent=5 // pred_region
        %s212 = ssub.s32 %s20, 1
        // Predicated region
        $region13: #{tpu_custom_call.1} parent=11 // pred_check
          %p213 = pneg %p67
        $region14: #{tpu_custom_call.1} parent=11 // pred_check_branch
          %215 = sbr.rel (%p213) target = $region16
        $region15: #{tpu_custom_call.1} parent=11 // pred_region
          %217 = vsyncadd [#allocation6], 0
          %s218 = sshll.u32 %s1, 4
          %s219 = int_to_ptr.hbm [resolvable:$true] %s218
          %s220 = sshll.u32 [#allocation5], 4
          %s221 = int_to_ptr.vmem [resolvable:$true] %s220
          %226 = dma.hbm_to_vmem [thread:$0]  %s219, 2048, %s221, [#allocation6], 128, 128, 8
        $region16: #{tpu_custom_call.1} parent=11 // pred_fallthru
          _
        // Predicated region
        $region17: #{tpu_custom_call.1} parent=11 // pred_check
          %p227 = pneg %p88
        $region18: #{tpu_custom_call.1} parent=11 // pred_check_branch
          %229 = sbr.rel (%p227) target = $region20
        $region19: #{tpu_custom_call.1} parent=11 // pred_region
          _
        $region20: #{tpu_custom_call.1} parent=11 // pred_fallthru
          _
        // Predicated region
        $region21: #{tpu_custom_call.1} parent=11 // pred_check
          %p230 = pneg %p109
        $region22: #{tpu_custom_call.1} parent=11 // pred_check_branch
          %232 = sbr.rel (%p230) target = $region24
        $region23: #{tpu_custom_call.1} parent=11 // pred_region
          %234 = vsyncadd [#allocation6], 0
          %s235 = sshll.u32 %s3, 4
          %s236 = int_to_ptr.hbm [resolvable:$true] %s235
          %s237 = sshll.u32 [#allocation7], 4
          %s238 = int_to_ptr.vmem [resolvable:$true] %s237
          %243 = dma.hbm_to_vmem [thread:$0]  %s236, 2048, %s238, [#allocation6], 128, 128, 8
        $region24: #{tpu_custom_call.1} parent=11 // pred_fallthru
          _
        // Predicated region
        $region25: #{tpu_custom_call.1} parent=11 // pred_check
          %p244 = pneg %p130
        $region26: #{tpu_custom_call.1} parent=11 // pred_check_branch
          %246 = sbr.rel (%p244) target = $region28
        $region27: #{tpu_custom_call.1} parent=11 // pred_region
          _
        $region28: #{tpu_custom_call.1} parent=11 // pred_fallthru
          _
        // Predicated region
        $region29: #{tpu_custom_call.1} parent=11 // pred_check
          %p247 = pneg %p151
        $region30: #{tpu_custom_call.1} parent=11 // pred_check_branch
          %249 = sbr.rel (%p247) target = $region32
        $region31: #{tpu_custom_call.1} parent=11 // pred_region
          _
        $region32: #{tpu_custom_call.1} parent=11 // pred_fallthru
          _
        // Predicated region
        $region33: #{tpu_custom_call.1} parent=11 // pred_check
          %p250 = pneg %p172
        $region34: #{tpu_custom_call.1} parent=11 // pred_check_branch
          %252 = sbr.rel (%p250) target = $region36
        $region35: #{tpu_custom_call.1} parent=11 // pred_region
          _
        $region36: #{tpu_custom_call.1} parent=11 // pred_fallthru
          _
      $region12: #{tpu_custom_call.1} parent=5 // pred_fallthru
        _
      %p253 = scmp.lt.s32.totalorder %s20, 2
      // Predicated region
      $region37: #{tpu_custom_call.1} parent=5 // pred_check
        %p254 = pneg %p253
      $region38: #{tpu_custom_call.1} parent=5 // pred_check_branch
        %256 = sbr.rel (%p254) target = $region40
      $region39: #{tpu_custom_call.1} parent=5 // pred_region
        // Predicated region
        $region41: #{tpu_custom_call.1} parent=39 // pred_check
          %p257 = pneg %p40
        $region42: #{tpu_custom_call.1} parent=39 // pred_check_branch
          %259 = sbr.rel (%p257) target = $region44
        $region43: #{tpu_custom_call.1} parent=39 // pred_region
          %s260 = sand.u32 %s30, 1
          %s261 = scalar_lea.sflag [#allocation3], %s260
          %s262 = sand.u32 %s30, 1
          %s263 = smul.addr %s262, 8
          %s264 = scalar_lea.vmem [#allocation2], %s263
          %266 = vsyncadd %s261, 0
          %s267 = smul.addr %s20, 8
          %s268 = scalar_lea.hbm %s0, %s267
          %s270 = sshll.u32 %s268, 4
          %s271 = int_to_ptr.hbm [resolvable:$true] %s270
          %s272 = sshll.u32 %s264, 4
          %s273 = int_to_ptr.vmem [resolvable:$true] %s272
          %275 = dma.hbm_to_vmem [thread:$0]  %s271, 128, %s273, %s261
        $region44: #{tpu_custom_call.1} parent=39 // pred_fallthru
          _
      $region40: #{tpu_custom_call.1} parent=5 // pred_fallthru
        _
      %p276 = scmp.le.s32.totalorder 1, %s20
      %p277 = scmp.lt.s32.totalorder %s20, 3
      %p278 = pnand %p276, %p277
      %p279 = pneg %p278
      // Predicated region
      $region45: #{tpu_custom_call.1} parent=5 // pred_check
        _
      $region46: #{tpu_custom_call.1} parent=5 // pred_check_branch
        %281 = sbr.rel (%p278) target = $region48
      $region47: #{tpu_custom_call.1} parent=5 // pred_region
        %s282 = ssub.s32 %s20, 1
        %s283 = sand.u32 %s33, 1
        %s284 = scalar_lea.sflag [#allocation3], %s283
        %s285 = sand.u32 %s33, 1
        %s286 = smul.addr %s285, 8
        %s287 = scalar_lea.vmem [#allocation2], %s286
        // Predicated region
        $region49: #{tpu_custom_call.1} parent=47 // pred_check
          %p288 = pneg %p46
        $region50: #{tpu_custom_call.1} parent=47 // pred_check_branch
          %290 = sbr.rel (%p288) target = $region52
        $region51: #{tpu_custom_call.1} parent=47 // pred_region
          %292 = dma.done %s284, 128
        $region52: #{tpu_custom_call.1} parent=47 // pred_fallthru
          _
        // Predicated region
        $region53: #{tpu_custom_call.1} parent=47 // pred_check
          %p293 = pneg %p67
        $region54: #{tpu_custom_call.1} parent=47 // pred_check_branch
          %295 = sbr.rel (%p293) target = $region56
        $region55: #{tpu_custom_call.1} parent=47 // pred_region
          %297 = dma.done [#allocation6], 2048
        $region56: #{tpu_custom_call.1} parent=47 // pred_fallthru
          _
        // Predicated region
        $region57: #{tpu_custom_call.1} parent=47 // pred_check
          %p298 = pneg %p109
        $region58: #{tpu_custom_call.1} parent=47 // pred_check_branch
          %300 = sbr.rel (%p298) target = $region60
        $region59: #{tpu_custom_call.1} parent=47 // pred_region
          %302 = dma.done [#allocation6], 2048
        $region60: #{tpu_custom_call.1} parent=47 // pred_fallthru
          _
        %s303 = sand.u32 %s33, 1
        %s304 = scalar_lea.sflag [#allocation3], %s303
        %s305 = sand.u32 %s33, 1
        %s306 = smul.addr %s305, 8
        %s307 = scalar_lea.vmem [#allocation2], %s306
        %p308 = pneg %p46
        %p309 = pneg %p43
        %p310 = pneg %p67
        %p311 = pneg %p64
        %p312 = pneg %p88
        %p313 = pneg %p85
        %p314 = pneg %p109
        %p315 = pneg %p106
        %p316 = pneg %p130
        %p317 = pneg %p127
        %p318 = pneg %p151
        %p319 = pneg %p148
        %p320 = pneg %p172
        %p321 = pneg %p169
        %p322 = pneg %p198
        %p323 = pneg %p195
        %s324 = sand.u32 %s185, 1
        %s325 = scalar_lea.sflag [#allocation4], %s324
        %s326 = sand.u32 %s185, 1
        %s327 = smul.addr %s326, 8
        %s328 = scalar_lea.vmem [#allocation8], %s327
        %v329 = vld [vmem:[%s287] sm:$0xff]
        %v330 = vld [vmem:[#allocation5] sm:$0xff]
        %v331 = vld [vmem:[#allocation5 + $0x8] sm:$0xff]
        %v332 = vld [vmem:[#allocation5 + $0x10] sm:$0xff]
        %v333 = vld [vmem:[#allocation5 + $0x18] sm:$0xff]
        %v334 = vld [vmem:[#allocation5 + $0x20] sm:$0xff]
        %v335 = vld [vmem:[#allocation5 + $0x28] sm:$0xff]
        %v336 = vld [vmem:[#allocation5 + $0x30] sm:$0xff]
        %v337 = vld [vmem:[#allocation5 + $0x38] sm:$0xff]
        %v338 = vld [vmem:[#allocation5 + $0x40] sm:$0xff]
        %v339 = vld [vmem:[#allocation5 + $0x48] sm:$0xff]
        %v340 = vld [vmem:[#allocation5 + $0x50] sm:$0xff]
        %v341 = vld [vmem:[#allocation5 + $0x58] sm:$0xff]
        %v342 = vld [vmem:[#allocation5 + $0x60] sm:$0xff]
        %v343 = vld [vmem:[#allocation5 + $0x68] sm:$0xff]
        %v344 = vld [vmem:[#allocation5 + $0x70] sm:$0xff]
        %v345 = vld [vmem:[#allocation5 + $0x78] sm:$0xff]
        %v346 = vld [vmem:[%s2] sm:$0x1]
        %v348 = vperm.slane %v346, 0
        %350 = vmatpush.msra.mxu0 %v345
        %351 = vmatpush.msra.mxu0 %v344
        %352 = vmatpush.msra.mxu0 %v343
        %353 = vmatpush.msra.mxu0 %v342
        %354 = vmatpush.msra.mxu0 %v341
        %355 = vmatpush.msra.mxu0 %v340
        %356 = vmatpush.msra.mxu0 %v339
        %357 = vmatpush.msra.mxu0 %v338
        %358 = vmatpush.msra.mxu0 %v337
        %359 = vmatpush.msra.mxu0 %v336
        %360 = vmatpush.msra.mxu0 %v335
        %361 = vmatpush.msra.mxu0 %v334
        %362 = vmatpush.msra.mxu0 %v333
        %363 = vmatpush.msra.mxu0 %v332
        %364 = vmatpush.msra.mxu0 %v331
        %365 = vmatpush.msra.mxu0 %v330
        %366 = vmatmul.f32.gmra.mxu0 %v329
        %v367 = vpop.f32.mrf.mxu0
        %v368 = vadd.f32 %v348, %v367
        %369 = vdwg.mxu0
        %v370 = vmul.f32 %v368, 0.5
        %v371 = vmul.f32 %v368, 0.70710677
        %v372 = vmul.f32 %v371, %v371
        %v373 = vmin.f32 16.0, %v372
        %v374 = vmul.f32 %v373, 2.1237322e-06
        %v375 = vadd.f32 %v374, 0.00028619796
        %v376 = vmul.f32 %v373, %v375
        %v377 = vadd.f32 %v376, 0.0036580483
        %v378 = vmul.f32 %v373, %v377
        %v379 = vadd.f32 %v378, 0.05243302
        %v380 = vmul.f32 %v373, %v379
        %v381 = vadd.f32 %v380, 0.18741608
        %v382 = vmul.f32 %v373, %v381
        %v383 = vadd.f32 %v382, 1.1283791
        %v384 = vmul.f32 %v371, %v383
        %v385 = vmul.f32 %v373, 3.8918573e-05
        %v386 = vadd.f32 %v385, 0.001143296
        %v387 = vmul.f32 %v373, %v386
        %v388 = vadd.f32 %v387, 0.014752088
        %v389 = vmul.f32 %v373, %v388
        %v390 = vadd.f32 %v389, 0.112945676
        %v391 = vmul.f32 %v373, %v390
        %v392 = vadd.f32 %v391, 0.4994258
        %v393 = vmul.f32 %v373, %v392
        %v394 = vadd.f32 %v393, 1.0
        %v395 = vrcp.pop %v394
        %v396 = vmul.f32 %v394, %v395
        %v397 = vsub.f32 1.0, %v396
        %v398 = vmul.f32 %v395, %v397
        %v399 = vadd.f32 %v395, %v398
        %vm400 = vweird.f32 %v394
        %vm401 = vweird.f32 %v395
        %vm402 = vmor %vm400, %vm401
        %v403 = vsel %vm402, %v395, %v399
        %v404 = vand.u32 2147483647, %v394
        %vm405 = vcmp.eq.f32.partialorder %v404, 8.507059e+37
        %v406 = vand.u32 %v394, 2147483648
        %v407 = vor.u32 1.1754944e-38, %v406
        %v408 = vsel %vm405, %v407, %v403
        %v409 = vmul.f32 %v384, %v408
        %v410 = vmin.f32 %v409, 1.0
        %v411 = vmax.f32 %v410, -1.0
        %v412 = vadd.f32 %v411, 1.0
        %v413 = vmul.f32 %v370, %v412
        %v414 = vld [vmem:[#allocation7] sm:$0xff]
        %v415 = vld [vmem:[#allocation7 + $0x8] sm:$0xff]
        %v416 = vld [vmem:[#allocation7 + $0x10] sm:$0xff]
        %v417 = vld [vmem:[#allocation7 + $0x18] sm:$0xff]
        %v418 = vld [vmem:[#allocation7 + $0x20] sm:$0xff]
        %v419 = vld [vmem:[#allocation7 + $0x28] sm:$0xff]
        %v420 = vld [vmem:[#allocation7 + $0x30] sm:$0xff]
        %v421 = vld [vmem:[#allocation7 + $0x38] sm:$0xff]
        %v422 = vld [vmem:[#allocation7 + $0x40] sm:$0xff]
        %v423 = vld [vmem:[#allocation7 + $0x48] sm:$0xff]
        %v424 = vld [vmem:[#allocation7 + $0x50] sm:$0xff]
        %v425 = vld [vmem:[#allocation7 + $0x58] sm:$0xff]
        %v426 = vld [vmem:[#allocation7 + $0x60] sm:$0xff]
        %v427 = vld [vmem:[#allocation7 + $0x68] sm:$0xff]
        %v428 = vld [vmem:[#allocation7 + $0x70] sm:$0xff]
        %v429 = vld [vmem:[#allocation7 + $0x78] sm:$0xff]
        %v430 = vld [vmem:[%s4] sm:$0x1]
        %v432 = vperm.slane %v430, 0
        %434 = vmatpush.msra.mxu0 %v429
        %435 = vmatpush.msra.mxu0 %v428
        %436 = vmatpush.msra.mxu0 %v427
        %437 = vmatpush.msra.mxu0 %v426
        %438 = vmatpush.msra.mxu0 %v425
        %439 = vmatpush.msra.mxu0 %v424
        %440 = vmatpush.msra.mxu0 %v423
        %441 = vmatpush.msra.mxu0 %v422
        %442 = vmatpush.msra.mxu0 %v421
        %443 = vmatpush.msra.mxu0 %v420
        %444 = vmatpush.msra.mxu0 %v419
        %445 = vmatpush.msra.mxu0 %v418
        %446 = vmatpush.msra.mxu0 %v417
        %447 = vmatpush.msra.mxu0 %v416
        %448 = vmatpush.msra.mxu0 %v415
        %449 = vmatpush.msra.mxu0 %v414
        %450 = vmatmul.f32.gmra.mxu0 %v413
        %v451 = vpop.f32.mrf.mxu0
        %v452 = vadd.f32 %v432, %v451
        %453 = vdwg.mxu0
        %454 = vadd.xlane.f32.xlu0 %v452
        %v455 = vpop.xlane.xlu0 %454
        %v456 = vrcp.pop 128.0
        %v457 = vmul.f32 128.0, %v456
        %v458 = vsub.f32 1.0, %v457
        %v459 = vmul.f32 %v456, %v458
        %v460 = vadd.f32 %v456, %v459
        %vm461 = vweird.f32 %v456
        %v462 = vsel %vm461, %v456, %v460
        %v463 = vmul.f32 %v455, %v462
        %v464 = vmul.f32 %v452, %v452
        %465 = vadd.xlane.f32.xlu0 %v464
        %v466 = vpop.xlane.xlu0 %465
        %v467 = vmul.f32 %v466, %v462
        %v468 = vmul.f32 %v463, %v463
        %v469 = vsub.f32 %v467, %v468
        %v470 = vmax.f32 %v469, 0.0
        %v471 = vadd.f32 %v470, 1e-05
        %v472 = vrsqrt.pop %v471
        %v473 = vmul.f32 %v472, %v471
        %v474 = vmul.f32 %v473, %v472
        %v475 = vmul.f32 0.5, %v474
        %v476 = vsub.f32 1.5, %v475
        %v477 = vmul.f32 %v472, %v476
        %vm478 = vweird.f32 %v471
        %vm479 = vweird.f32 %v472
        %vm480 = vmor %vm478, %vm479
        %v481 = vsel %vm480, %v472, %v477
        %v482 = vsub.f32 %v452, %v463
        %v483 = vmul.f32 %v482, %v481
        %v484 = vld [vmem:[%s5] sm:$0x1]
        %v486 = vperm.slane %v484, 0
        %v488 = vmul.f32 %v483, %v486
        %v489 = vld [vmem:[%s6] sm:$0x1]
        %v491 = vperm.slane %v489, 0
        %v493 = vadd.f32 %v488, %v491
        %494 = vst [vmem:[%s328] sm:$0xff] %v493
        %s495 = sand.u32 %s185, 1
        %s496 = scalar_lea.sflag [#allocation4], %s495
        %s497 = sand.u32 %s185, 1
        %s498 = smul.addr %s497, 8
        %s499 = scalar_lea.vmem [#allocation8], %s498
        // Predicated region
        $region61: #{tpu_custom_call.1} parent=47 // pred_check
          %p500 = pneg %p195
        $region62: #{tpu_custom_call.1} parent=47 // pred_check_branch
          %502 = sbr.rel (%p500) target = $region64
        $region63: #{tpu_custom_call.1} parent=47 // pred_region
          %504 = vsyncadd %s496, 0
          %s505 = smul.addr %s25, 8
          %s506 = scalar_lea.hbm %s7, %s505
          %s508 = sshll.u32 %s499, 4
          %s509 = int_to_ptr.vmem [resolvable:$true] %s508
          %s510 = sshll.u32 %s506, 4
          %s511 = int_to_ptr.hbm [resolvable:$true] %s510
          %513 = dma.vmem_to_hbm [thread:$0]  %s509, 128, %s511, %s496
        $region64: #{tpu_custom_call.1} parent=47 // pred_fallthru
          _
      $region48: #{tpu_custom_call.1} parent=5 // pred_fallthru
        _
      %p514 = scmp.le.s32.totalorder 2, %s20
      // Predicated region
      $region65: #{tpu_custom_call.1} parent=5 // pred_check
        %p515 = pneg %p514
      $region66: #{tpu_custom_call.1} parent=5 // pred_check_branch
        %517 = sbr.rel (%p515) target = $region68
      $region67: #{tpu_custom_call.1} parent=5 // pred_region
        %s518 = ssub.s32 %s20, 2
        // Predicated region
        $region69: #{tpu_custom_call.1} parent=67 // pred_check
          %p519 = pneg %p201
        $region70: #{tpu_custom_call.1} parent=67 // pred_check_branch
          %521 = sbr.rel (%p519) target = $region72
        $region71: #{tpu_custom_call.1} parent=67 // pred_region
          %s522 = sand.u32 %s186, 1
          %s523 = scalar_lea.sflag [#allocation4], %s522
          %s524 = sand.u32 %s186, 1
          %s525 = smul.addr %s524, 8
          %s526 = scalar_lea.vmem [#allocation8], %s525
          %528 = dma.done %s523, 128
        $region72: #{tpu_custom_call.1} parent=67 // pred_fallthru
          _
      $region68: #{tpu_custom_call.1} parent=5 // pred_fallthru
        _
    $region6: #{tpu_custom_call.1} parent=1 // loop_footer
      %s24 = sadd.s32 1, %s20
    $region7: #{tpu_custom_call.1} parent=1 // loop_footer_branch
      %19 = sbr.rel target = $region3
    $region8: #{tpu_custom_call.1} parent=1 // loop_exit
      _
    %529 = vsyncpa [#allocation3], 1
    %s530 = scalar_lea.sflag [#allocation3], 1
    %531 = vsyncpa %s530, 1
    %532 = vsyncpa [#allocation6], 1
    %533 = vsyncpa [#allocation4], 1
    %s534 = scalar_lea.sflag [#allocation4], 1
    %535 = vsyncpa %s534, 1

</llo_original>
